<compile_context>
chip_gen: v7x
topology: tpu7x:2x2x1
jax: 0.10.0
libtpu: 0.0.40
codegen_flags: <defaults>
</compile_context>

<pallas_src>
import functools
import math

import jax
import jax.numpy as jnp
from jax.experimental import pallas as pl
from jax.experimental.pallas import tpu as pltpu

LANES = 128
SUBLANES = 8
PAIR_LANES = 2 * LANES          # one (., 256) row holds 128 interleaved (lat, lon) pairs
MAX_BLOCK_ROWS = 1024           # (1024, 256) f32 block = 1 MiB per input per step
EARTH_RADIUS_KM = 6371.0
_DEG2RAD = math.pi / 180.0


@functools.cache
def _partner_shift() -> int:
    """pltpu.roll shift realizing out[..., l] = x[..., l + 1] on a 256-lane axis.

    Probed once with a tiny kernel so the lat/lon pairing is robust to the
    hardware rotate-direction convention (runs once, microseconds)."""
    def probe(x_ref, o_ref):
        o_ref[...] = pltpu.roll(x_ref[...], shift=1, axis=1)

    x = jax.lax.broadcasted_iota(jnp.int32, (SUBLANES, LANES), 1)
    y = pl.pallas_call(
        probe, out_shape=jax.ShapeDtypeStruct((SUBLANES, LANES), jnp.int32))(x)
    # np.roll convention: y[0, 1] == 0  -> need shift == -1 == PAIR_LANES - 1.
    # Opposite convention: y[0, 1] == 2 -> need shift == +1.
    return 1 if int(y[0, 1]) == 2 else PAIR_LANES - 1


def _haversine_kernel(pred_ref, tgt_ref, out_ref, acc_ref, *, partner_shift):
    """pred_ref / tgt_ref: (BR, 256) blocks; lanes = [lat0, lon0, lat1, lon1, ...] deg.
    out_ref: (1, 1) SMEM sum of half-angles (c / 2).
    acc_ref: (8, 128) f32 VMEM accumulator."""
    step = pl.program_id(0)

    @pl.when(step == 0)
    def _():
        acc_ref[...] = jnp.zeros_like(acc_ref)

    d2r = jnp.float32(_DEG2RAD)
    half_d2r = jnp.float32(0.5 * _DEG2RAD)
    pred = pred_ref[...]
    tgt = tgt_ref[...]

    # Even lanes hold latitude quantities, odd lanes longitude quantities.
    s = jnp.sin((tgt - pred) * half_d2r)            # sin(dlat/2) | sin(dlon/2)
    s2 = s * s
    cos_sum = jnp.cos((pred + tgt) * d2r)           # cos(lat1 + lat2) at even lanes
    # cos(lat1)cos(lat2) = 0.5*(cos(dlat) + cos(lat1+lat2)); cos(dlat) = 1 - 2 sin^2(dlat/2)
    cos_prod = 0.5 * ((1.0 - 2.0 * s2) + cos_sum)   # valid at even lanes
    # Bring the same pair's sin^2(dlon/2) (lane l+1) onto its lat lane l (XLU rotate).
    s2_lon = pltpu.roll(s2, shift=partner_shift, axis=1)
    a = s2 + cos_prod * s2_lon                      # valid at even lanes

    # Compact the valid (even-lane) values of both 128-lane columns into one
    # dense (BR, 128) tile so sqrt/atan2 only run on useful lanes.  Either
    # rotate direction places column-1's even lanes onto odd positions, so this
    # step is insensitive to the rotate convention (we only need each valid
    # element exactly once before the reduction).
    a0 = a[:, :LANES]
    a1 = a[:, LANES:]
    lane = jax.lax.broadcasted_iota(jnp.int32, a0.shape, 1)
    a_dense = jnp.where((lane & 1) == 0, a0, pltpu.roll(a1, shift=1, axis=1))
    a_dense = jnp.clip(a_dense, 0.0, 1.0)           # guard sqrt against rounding

    # Half-angle only; the factor 2 * EARTH_RADIUS / n is applied once outside.
    h = jnp.arctan2(jnp.sqrt(a_dense), jnp.sqrt(1.0 - a_dense))

    # Zero-padded pairs give h == 0, so no masking is needed.  Fold the block
    # down to a single (8, 128) vreg with tile-aligned (pure VALU) adds.
    br = h.shape[0]
    acc_ref[...] += jnp.sum(h.reshape(br // SUBLANES, SUBLANES, LANES), axis=0)

    @pl.when(step == pl.num_programs(0) - 1)
    def _():
        out_ref[0, 0] = jnp.sum(acc_ref[...])


def haversine_loss(outputs: jax.Array, targets: jax.Array) -> jax.Array:
    """outputs, targets: (N, 2) arrays, [:, 0] = lat deg, [:, 1] = lon deg.
    Returns scalar float32 mean haversine distance (km)."""
    assert outputs.shape == targets.shape and outputs.ndim == 2 and outputs.shape[1] == 2
    n = outputs.shape[0]

    # --- balanced tiling (padding waste stays tiny for any N) ---------------
    rows = pl.cdiv(n, LANES)                               # 128-pair rows needed
    blocks = pl.cdiv(rows, MAX_BLOCK_ROWS)
    block_rows = pl.cdiv(pl.cdiv(rows, blocks), SUBLANES) * SUBLANES
    blocks = pl.cdiv(rows, block_rows)
    rows_pad = blocks * block_rows
    n_pad = rows_pad * LANES

    def _prep(x):
        x = x.astype(jnp.float32)
        if n_pad != n:
            x = jnp.pad(x, ((0, n_pad - n), (0, 0)))
        return x.reshape(rows_pad, PAIR_LANES)             # contiguous: no transpose

    kernel = functools.partial(_haversine_kernel, partner_shift=_partner_shift())

    total = pl.pallas_call(
        kernel,
        out_shape=jax.ShapeDtypeStruct((1, 1), jnp.float32),
        grid_spec=pltpu.PrefetchScalarGridSpec(
            num_scalar_prefetch=0,
            grid=(blocks,),
            in_specs=[
                pl.BlockSpec((block_rows, PAIR_LANES), lambda i: (i, 0)),
                pl.BlockSpec((block_rows, PAIR_LANES), lambda i: (i, 0)),
            ],
            out_specs=pl.BlockSpec((1, 1), lambda i: (0, 0),
                                   memory_space=pltpu.SMEM),
            scratch_shapes=[pltpu.VMEM((SUBLANES, LANES), jnp.float32)],
        ),
        compiler_params=pltpu.CompilerParams(
            dimension_semantics=("arbitrary",)),
        cost_estimate=pl.CostEstimate(
            flops=30 * n_pad,
            transcendentals=7 * n_pad,
            bytes_accessed=4 * 4 * n_pad),
    )(_prep(outputs), _prep(targets))

    return total[0, 0] * jnp.float32(2.0 * EARTH_RADIUS_KM) / jnp.float32(n)


def _haversine_loss_ref(outputs, targets):
    """Pure-JAX reference mirroring the PyTorch module."""
    lat1, lon1 = outputs[:, 0], outputs[:, 1]
    lat2, lon2 = targets[:, 0], targets[:, 1]
    d2r = jnp.float32(_DEG2RAD)
    lat1, lon1, lat2, lon2 = lat1 * d2r, lon1 * d2r, lat2 * d2r, lon2 * d2r
    dlat, dlon = lat2 - lat1, lon2 - lon1
    a = jnp.sin(dlat / 2) ** 2 + jnp.cos(lat1) * jnp.cos(lat2) * jnp.sin(dlon / 2) ** 2
    c = 2 * jnp.arctan2(jnp.sqrt(a), jnp.sqrt(1 - a))
    return (jnp.float32(EARTH_RADIUS_KM) * c).mean()


def _make_inputs(key, n):
    k1, k2, k3, k4 = jax.random.split(key, 4)
    outputs = jnp.stack(
        [jax.random.uniform(k1, (n,), minval=-90.0, maxval=90.0),
         jax.random.uniform(k2, (n,), minval=-180.0, maxval=180.0)], axis=1
    ).astype(jnp.float32)
    targets = jnp.stack(
        [jax.random.uniform(k3, (n,), minval=-90.0, maxval=90.0),
         jax.random.uniform(k4, (n,), minval=-180.0, maxval=180.0)], axis=1
    ).astype(jnp.float32)
    return outputs, targets


if __name__ == "__main__":
    # Small test matching the (N, 2) convention of the module.
    outputs, targets = _make_inputs(jax.random.PRNGKey(0), 8)
    loss = jax.block_until_ready(haversine_loss(outputs, targets))
    ref = _haversine_loss_ref(outputs, targets)
    assert jnp.allclose(loss, ref, rtol=1e-5, atol=1e-3), (loss, ref)

    # Larger test to exercise multi-block accumulation + padding path.
    outputs_l, targets_l = _make_inputs(jax.random.PRNGKey(1), 200_000)
    loss_l = jax.block_until_ready(haversine_loss(outputs_l, targets_l))
    ref_l = _haversine_loss_ref(outputs_l, targets_l)
    assert jnp.allclose(loss_l, ref_l, rtol=1e-4, atol=1e-2), (loss_l, ref_l)

    print("KERNEL_OK")
</pallas_src>

<mosaic_0001>
module attributes {stable_mosaic.version = 11 : i64} {
  func.func @probe(%arg0: memref<8x128xi32, #tpu.memory_space<vmem>>, %arg1: memref<8x128xi32, #tpu.memory_space<vmem>>) attributes {dimension_semantics = [], scalar_prefetch = 0 : i64, scratch_operands = 0 : i64, tpu.core_type = #tpu.core_type<tc>} {
    %c0 = arith.constant 0 : index
    %c0_0 = arith.constant 0 : index
    %0 = vector.load %arg0[%c0, %c0_0] : memref<8x128xi32, #tpu.memory_space<vmem>>, vector<8x128xi32>
    %c1_i32 = arith.constant 1 : i32
    %1 = tpu.dynamic_rotate %0 by %c1_i32 dim 1 : vector<8x128xi32>, i32 -> vector<8x128xi32>
    %c0_1 = arith.constant 0 : index
    %c0_2 = arith.constant 0 : index
    %2 = vector.load %arg1[%c0_1, %c0_2] : memref<8x128xi32, #tpu.memory_space<vmem>>, vector<8x128xi32>
    tpu.vector_store %arg1[%c0_1, %c0_2], %1 {strides = array<i32>} : memref<8x128xi32, #tpu.memory_space<vmem>>, vector<8x128xi32>,
    return
  }
}

</mosaic_0001>

<llo_original>
// kernel: tpu_custom_call.1
$region0: #{tpu_custom_call.1}
  #allocation0 [shape = 'u32[]', space=smem, size = 0x4, offset = 0x4, fixed_abs, tag = 'smem constant byte address 0x4 - core index']
  #allocation1 [shape = 'u32[144,128]{1,0:T(1,128)}', space=vmem, size = 0x12000, scoped, tag = 'internal scratch']
  %s0 = inlined_call_operand.hbm [shape: s32[8,128], index: 0, kind: input, shape index: {}]
  %s1 = inlined_call_operand.hbm [shape: s32[8,128], index: 1, kind: output, shape index: {}]
  %s2 = sld [smem:[#allocation0]]
  $region18: #{tpu_custom_call.1} parent=0
    _
  %s4 = ssub.s32 1, %s2
  %s5 = scalar_select 0, %s4, %s2
  $region1: #{tpu_custom_call.1} parent=0
    #allocation2 [shape = 'u8[4096]{0}', space=vmem, size = 0x1000, scoped, tag = 'input window, operand 0, single buffered']
    #allocation3 [shape = 's32[1]{0}', space=sflag, size = 0x4, scoped, tag = 'scoped memory for tpu_custom_call.1']
    #allocation4 [shape = 's32[1]{0}', space=sflag, size = 0x4, scoped, tag = 'scoped memory for tpu_custom_call.1']
    #allocation5 [shape = 'u8[4096]{0}', space=vmem, size = 0x1000, scoped, tag = 'output window, operand 0, single buffered']
    %6 = vsyncpa [#allocation3], 0
    %7 = vsyncpa [#allocation4], 0
    // Predicated region
    $region2: #{tpu_custom_call.1} parent=1 // pred_check
      _
    $region3: #{tpu_custom_call.1} parent=1 // pred_check_branch
      %9 = sbr.rel (0) target = $region5
    $region4: #{tpu_custom_call.1} parent=1 // pred_region
      %s11 = ssub.s32 128, 128
      %12 = vsyncadd [#allocation3], %s11
      %s14 = sshll.u32 [#allocation2], 4
      %s15 = int_to_ptr.vmem [resolvable:$true] %s14
      %17 = dma.hbm_to_vmem [thread:$0]  %s0, 128, %s15, [#allocation3]
    $region5: #{tpu_custom_call.1} parent=1 // pred_fallthru
      _
    // Predicated region
    $region6: #{tpu_custom_call.1} parent=1 // pred_check
      _
    $region7: #{tpu_custom_call.1} parent=1 // pred_check_branch
      %19 = sbr.rel (0) target = $region9
    $region8: #{tpu_custom_call.1} parent=1 // pred_region
      %20 = dma.done [#allocation3], 128
    $region9: #{tpu_custom_call.1} parent=1 // pred_fallthru
      _
    %v21 = vld [vmem:[#allocation2] sm:$0xff]
    %22 = vrot.lane.b32.xlu0 %v21, 1
    %v23 = vpop.permute.xlu0 %22
    %24 = vst [vmem:[#allocation5] sm:$0xff] %v23
    // Predicated region
    $region10: #{tpu_custom_call.1} parent=1 // pred_check
      _
    $region11: #{tpu_custom_call.1} parent=1 // pred_check_branch
      %26 = sbr.rel (0) target = $region13
    $region12: #{tpu_custom_call.1} parent=1 // pred_region
      %s28 = ssub.s32 128, 128
      %29 = vsyncadd [#allocation4], %s28
      %s31 = sshll.u32 [#allocation5], 4
      %s32 = int_to_ptr.vmem [resolvable:$true] %s31
      %34 = dma.vmem_to_hbm [thread:$0]  %s32, 128, %s1, [#allocation4]
    $region13: #{tpu_custom_call.1} parent=1 // pred_fallthru
      _
    // Predicated region
    $region14: #{tpu_custom_call.1} parent=1 // pred_check
      _
    $region15: #{tpu_custom_call.1} parent=1 // pred_check_branch
      %36 = sbr.rel (0) target = $region17
    $region16: #{tpu_custom_call.1} parent=1 // pred_region
      %37 = dma.done [#allocation4], 128
    $region17: #{tpu_custom_call.1} parent=1 // pred_fallthru
      _
    %38 = vsyncpa [#allocation3], 1
    %39 = vsyncpa [#allocation4], 1

</llo_original>
